<compile_context>
chip_gen: v7x
topology: tpu7x:2x2x1
jax: 0.10.0
libtpu: 0.0.40
codegen_flags: <defaults>
</compile_context>

<pallas_src>
import math

import jax
import jax.numpy as jnp
from jax.experimental import pallas as pl
from jax.experimental.pallas import tpu as pltpu


def _linear_kernel(x_ref, wt_ref, o_ref, acc_ref):
    # x_ref:  (tm, tk)  input tile
    # wt_ref: (tk, tn)  pre-transposed weight tile (d_in x d_out layout)
    # o_ref:  (tm, tn)  output tile (resident across the K grid axis)
    # acc_ref:(tm, tn)  f32 accumulator scratch
    @pl.when(pl.program_id(2) == 0)
    def _():
        acc_ref[...] = jnp.zeros_like(acc_ref)

    acc_ref[...] += jnp.dot(
        x_ref[...], wt_ref[...], preferred_element_type=jnp.float32
    )

    @pl.when(pl.program_id(2) == pl.num_programs(2) - 1)
    def _():
        o_ref[...] = acc_ref[...].astype(o_ref.dtype)


def _round_up(x: int, n: int) -> int:
    return ((x + n - 1) // n) * n


def _pick_tile(dim: int, preferred: int, align: int) -> int:
    """Tile = preferred for large dims, else the whole (aligned) dim."""
    aligned_dim = _round_up(dim, align)
    return min(preferred, aligned_dim)


def linear_forward(
    x: jax.Array,
    weight: jax.Array,
    *,
    tm: int = 256,
    tn: int = 256,
    tk: int = 512,
) -> jax.Array:
    """Apply y = x @ weight.T with a tiled Pallas TPU matmul kernel.

    x:      (..., d_in)
    weight: (d_out, d_in)   (PyTorch nn.Linear convention)
    returns (..., d_out)
    """
    d_out, d_in = weight.shape
    assert x.shape[-1] == d_in, (x.shape, weight.shape)

    leading = x.shape[:-1]
    m = 1
    for s in leading:
        m *= s
    x2d = x.reshape(m, d_in)

    # One-time wrapper transpose -> canonical (K, N) RHS layout for the MXU.
    w_t = weight.T  # (d_in, d_out)

    # Tile sizes: sublane dims align to 8, lane dims align to 128.
    tm_ = _pick_tile(m, tm, 8)
    tk_ = _pick_tile(d_in, tk, 128)
    tn_ = _pick_tile(d_out, tn, 128)

    m_pad = _round_up(m, tm_)
    k_pad = _round_up(d_in, tk_)
    n_pad = _round_up(d_out, tn_)

    if (m_pad, k_pad) != (m, d_in):
        x2d = jnp.pad(x2d, ((0, m_pad - m), (0, k_pad - d_in)))
    if (k_pad, n_pad) != (d_in, d_out):
        w_t = jnp.pad(w_t, ((0, k_pad - d_in), (0, n_pad - d_out)))

    grid = (m_pad // tm_, n_pad // tn_, k_pad // tk_)

    cost = pl.CostEstimate(
        flops=2 * m * d_in * d_out,
        transcendentals=0,
        bytes_accessed=(
            m * d_in * x.dtype.itemsize
            + d_in * d_out * weight.dtype.itemsize
            + m * d_out * x.dtype.itemsize
        ),
    )

    out2d = pl.pallas_call(
        _linear_kernel,
        out_shape=jax.ShapeDtypeStruct((m_pad, n_pad), x.dtype),
        grid_spec=pltpu.PrefetchScalarGridSpec(
            num_scalar_prefetch=0,
            grid=grid,
            in_specs=[
                pl.BlockSpec((tm_, tk_), lambda i, j, k: (i, k)),
                pl.BlockSpec((tk_, tn_), lambda i, j, k: (k, j)),
            ],
            out_specs=pl.BlockSpec((tm_, tn_), lambda i, j, k: (i, j)),
            scratch_shapes=[pltpu.VMEM((tm_, tn_), jnp.float32)],
        ),
        compiler_params=pltpu.CompilerParams(
            dimension_semantics=("parallel", "parallel", "arbitrary"),
            vmem_limit_bytes=64 * 1024 * 1024,
        ),
        cost_estimate=cost,
    )(x2d, w_t)

    out2d = out2d[:m, :d_out]
    return out2d.reshape(*leading, d_out)


def init_linear_weight(key, in_features: int, out_features: int, dtype=jnp.float32):
    """Deterministic truncated-normal init matching the PyTorch module."""
    std = math.sqrt(2.0 / (in_features + out_features))
    # trunc_normal_(mean=0, std=std, a=-3*std, b=3*std)
    w = jax.random.truncated_normal(
        key, lower=-3.0, upper=3.0, shape=(out_features, in_features), dtype=jnp.float32
    ) * std
    return w.astype(dtype)


if __name__ == "__main__":
    key = jax.random.PRNGKey(0)
    k_w, k_x, k_w2, k_x2 = jax.random.split(key, 4)

    # --- Small-shape check (matches the module's toy config) ---------------
    batch, seq, d_in, d_out = 2, 8, 32, 64
    weight = init_linear_weight(k_w, d_in, d_out, dtype=jnp.float32)
    x = jax.random.normal(k_x, (batch, seq, d_in), dtype=jnp.float32)

    y = linear_forward(x, weight)
    y = jax.block_until_ready(y)

    y_ref = jnp.einsum("bsd,od->bso", x, weight)
    assert y.shape == (batch, seq, d_out), y.shape
    assert jnp.allclose(y, y_ref, atol=1e-5, rtol=1e-5), float(
        jnp.max(jnp.abs(y - y_ref))
    )

    # --- Exercise the multi-step K-accumulation / tiled path ---------------
    batch2, seq2, d_in2, d_out2 = 2, 128, 1024, 256
    weight2 = init_linear_weight(k_w2, d_in2, d_out2, dtype=jnp.float32)
    x2 = jax.random.normal(k_x2, (batch2, seq2, d_in2), dtype=jnp.float32)

    y2 = linear_forward(x2, weight2)
    y2 = jax.block_until_ready(y2)

    y2_ref = jnp.einsum("bsd,od->bso", x2, weight2)
    assert y2.shape == (batch2, seq2, d_out2), y2.shape
    assert jnp.allclose(y2, y2_ref, atol=1e-4, rtol=1e-4), float(
        jnp.max(jnp.abs(y2 - y2_ref))
    )

    print("KERNEL_OK")
</pallas_src>

<mosaic_0001>
module attributes {stable_mosaic.version = 11 : i64} {
  func.func @_linear_kernel(%arg0: i32, %arg1: i32, %arg2: i32, %arg3: memref<16x128xf32, #tpu.memory_space<vmem>>, %arg4: memref<128x128xf32, #tpu.memory_space<vmem>>, %arg5: memref<16x128xf32, #tpu.memory_space<vmem>>, %arg6: memref<16x128xf32, #tpu.memory_space<vmem>>) attributes {dimension_semantics = [#tpu.dimension_semantics<parallel>, #tpu.dimension_semantics<parallel>, #tpu.dimension_semantics<arbitrary>], iteration_bounds = array<i64: 1, 1, 1>, scalar_prefetch = 0 : i64, scratch_operands = 1 : i64, tpu.core_type = #tpu.core_type<tc>, window_params = [{transform_indices = @transform_0, window_bounds = array<i64: 16, 128>}, {transform_indices = @transform_1, window_bounds = array<i64: 128, 128>}, {transform_indices = @transform_2, window_bounds = array<i64: 16, 128>}]} {
    %c0_i32 = arith.constant 0 : i32
    %0 = arith.cmpi eq, %arg2, %c0_i32 : i32
    %1 = arith.extui %0 : i1 to i32
    %c0_i32_0 = arith.constant 0 : i32
    %2 = arith.cmpi ne, %1, %c0_i32_0 : i32
    scf.if %2 {
      %cst_10 = arith.constant 0.000000e+00 : f32
      %12 = vector.broadcast %cst_10 : f32 to vector<16x128xf32>
      %c0_11 = arith.constant 0 : index
      %c0_12 = arith.constant 0 : index
      %13 = vector.load %arg6[%c0_11, %c0_12] : memref<16x128xf32, #tpu.memory_space<vmem>>, vector<16x128xf32>
      tpu.vector_store %arg6[%c0_11, %c0_12], %12 {strides = array<i32>} : memref<16x128xf32, #tpu.memory_space<vmem>>, vector<16x128xf32>,
    } else {
    }
    %c0 = arith.constant 0 : index
    %c0_1 = arith.constant 0 : index
    %3 = vector.load %arg6[%c0, %c0_1] : memref<16x128xf32, #tpu.memory_space<vmem>>, vector<16x128xf32>
    %c0_2 = arith.constant 0 : index
    %c0_3 = arith.constant 0 : index
    %4 = vector.load %arg3[%c0_2, %c0_3] : memref<16x128xf32, #tpu.memory_space<vmem>>, vector<16x128xf32>
    %c0_4 = arith.constant 0 : index
    %c0_5 = arith.constant 0 : index
    %5 = vector.load %arg4[%c0_4, %c0_5] : memref<128x128xf32, #tpu.memory_space<vmem>>, vector<128x128xf32>
    %cst = arith.constant dense<0.000000e+00> : vector<16x128xf32>
    %6 = tpu.matmul %4, %5, %cst {dimension_numbers = #tpu.dot_dimension_numbers<[1], [0], [0], [1], [0, 0, 1, 1], [], []>} : vector<16x128xf32>, vector<128x128xf32>, vector<16x128xf32> -> vector<16x128xf32>
    %7 = arith.addf %3, %6 : vector<16x128xf32>
    %c0_6 = arith.constant 0 : index
    %c0_7 = arith.constant 0 : index
    %8 = vector.load %arg6[%c0_6, %c0_7] : memref<16x128xf32, #tpu.memory_space<vmem>>, vector<16x128xf32>
    tpu.vector_store %arg6[%c0_6, %c0_7], %7 {strides = array<i32>} : memref<16x128xf32, #tpu.memory_space<vmem>>, vector<16x128xf32>,
    %c0_i32_8 = arith.constant 0 : i32
    %9 = arith.cmpi eq, %arg2, %c0_i32_8 : i32
    %10 = arith.extui %9 : i1 to i32
    %c0_i32_9 = arith.constant 0 : i32
    %11 = arith.cmpi ne, %10, %c0_i32_9 : i32
    scf.if %11 {
      %c0_10 = arith.constant 0 : index
      %c0_11 = arith.constant 0 : index
      %12 = vector.load %arg6[%c0_10, %c0_11] : memref<16x128xf32, #tpu.memory_space<vmem>>, vector<16x128xf32>
      %c0_12 = arith.constant 0 : index
      %c0_13 = arith.constant 0 : index
      %13 = vector.load %arg5[%c0_12, %c0_13] : memref<16x128xf32, #tpu.memory_space<vmem>>, vector<16x128xf32>
      tpu.vector_store %arg5[%c0_12, %c0_13], %12 {strides = array<i32>} : memref<16x128xf32, #tpu.memory_space<vmem>>, vector<16x128xf32>,
    } else {
    }
    return
  }
  func.func @transform_0(%arg0: i32, %arg1: i32, %arg2: i32) -> (i32, i32) {
    %c0_i32 = arith.constant 0 : i32
    return %arg0, %arg2 : i32, i32
  }
  func.func @transform_1(%arg0: i32, %arg1: i32, %arg2: i32) -> (i32, i32) {
    %c0_i32 = arith.constant 0 : i32
    return %arg2, %arg1 : i32, i32
  }
  func.func @transform_2(%arg0: i32, %arg1: i32, %arg2: i32) -> (i32, i32) {
    %c0_i32 = arith.constant 0 : i32
    return %arg0, %arg1 : i32, i32
  }
}

</mosaic_0001>

<llo_original>
// kernel: tpu_custom_call.1
$region0: #{tpu_custom_call.1}
  #allocation0 [shape = 'u32[]', space=smem, size = 0x4, offset = 0x4, fixed_abs, tag = 'smem constant byte address 0x4 - core index']
  #allocation1 [shape = 'u32[144,128]{1,0:T(1,128)}', space=vmem, size = 0x12000, scoped, tag = 'internal scratch']
  #allocation2 [shape = 'f32[16,128]{1,0:T(8,128)}', space=vmem, size = 0x2000, scoped, tag = 'scratch operand']
  %s0 = inlined_call_operand.hbm [shape: f32[16,128], index: 0, kind: input, shape index: {}]
  %s1 = inlined_call_operand.hbm [shape: f32[128,128], index: 1, kind: input, shape index: {}]
  %s2 = inlined_call_operand.hbm [shape: f32[16,128], index: 2, kind: output, shape index: {}]
  %s3 = sld [smem:[#allocation0]]
  $region34: #{tpu_custom_call.1} parent=0
    _
  %s5 = ssub.s32 1, %s3
  %s6 = scalar_select 0, %s5, %s3
  $region1: #{tpu_custom_call.1} parent=0
    #allocation3 [shape = 'u8[8192]{0}', space=vmem, size = 0x2000, scoped, tag = 'input window, operand 0, single buffered']
    #allocation4 [shape = 's32[1]{0}', space=sflag, size = 0x4, scoped, tag = 'scoped memory for tpu_custom_call.1']
    #allocation5 [shape = 's32[1]{0}', space=sflag, size = 0x4, scoped, tag = 'scoped memory for tpu_custom_call.1']
    #allocation6 [shape = 'u8[65536]{0}', space=vmem, size = 0x10000, scoped, tag = 'input window, operand 1, single buffered']
    #allocation7 [shape = 's32[1]{0}', space=sflag, size = 0x4, scoped, tag = 'scoped memory for tpu_custom_call.1']
    #allocation8 [shape = 'u8[8192]{0}', space=vmem, size = 0x2000, scoped, tag = 'output window, operand 0, single buffered']
    %7 = vsyncpa [#allocation4], 0
    %8 = vsyncpa [#allocation7], 0
    %9 = vsyncpa [#allocation5], 0
    // Predicated region
    $region2: #{tpu_custom_call.1} parent=1 // pred_check
      _
    $region3: #{tpu_custom_call.1} parent=1 // pred_check_branch
      %11 = sbr.rel (0) target = $region5
    $region4: #{tpu_custom_call.1} parent=1 // pred_region
      %s13 = ssub.s32 256, 256
      %14 = vsyncadd [#allocation4], %s13
      %s15 = sshll.u32 [#allocation3], 4
      %s16 = int_to_ptr.vmem [resolvable:$true] %s15
      %21 = dma.hbm_to_vmem [thread:$0]  %s0, 256, %s16, [#allocation4], 128, 128, 8
    $region5: #{tpu_custom_call.1} parent=1 // pred_fallthru
      _
    // Predicated region
    $region6: #{tpu_custom_call.1} parent=1 // pred_check
      _
    $region7: #{tpu_custom_call.1} parent=1 // pred_check_branch
      %23 = sbr.rel (0) target = $region9
    $region8: #{tpu_custom_call.1} parent=1 // pred_region
      %s25 = ssub.s32 2048, 2048
      %26 = vsyncadd [#allocation7], %s25
      %s27 = sshll.u32 [#allocation6], 4
      %s28 = int_to_ptr.vmem [resolvable:$true] %s27
      %33 = dma.hbm_to_vmem [thread:$0]  %s1, 2048, %s28, [#allocation7], 128, 128, 8
    $region9: #{tpu_custom_call.1} parent=1 // pred_fallthru
      _
    // Predicated region
    $region10: #{tpu_custom_call.1} parent=1 // pred_check
      _
    $region11: #{tpu_custom_call.1} parent=1 // pred_check_branch
      %35 = sbr.rel (0) target = $region13
    $region12: #{tpu_custom_call.1} parent=1 // pred_region
      %36 = dma.done [#allocation4], 256
    $region13: #{tpu_custom_call.1} parent=1 // pred_fallthru
      _
    // Predicated region
    $region14: #{tpu_custom_call.1} parent=1 // pred_check
      _
    $region15: #{tpu_custom_call.1} parent=1 // pred_check_branch
      %38 = sbr.rel (0) target = $region17
    $region16: #{tpu_custom_call.1} parent=1 // pred_region
      %39 = dma.done [#allocation7], 2048
    $region17: #{tpu_custom_call.1} parent=1 // pred_fallthru
      _
    %p40 = scmp.eq.s32.totalorder 0, 0
    // Predicated region
    $region18: #{tpu_custom_call.1} parent=1 // pred_check
      %p41 = pneg %p40
    $region19: #{tpu_custom_call.1} parent=1 // pred_check_branch
      %43 = sbr.rel (%p41) target = $region21
    $region20: #{tpu_custom_call.1} parent=1 // pred_region
      %44 = vst [vmem:[#allocation2] sm:$0xff] 0.0
      %45 = vst [vmem:[#allocation2 + $0x8] sm:$0xff] 0.0
    $region21: #{tpu_custom_call.1} parent=1 // pred_fallthru
      _
    %v46 = vld [vmem:[#allocation2] sm:$0xff]
    %v47 = vld [vmem:[#allocation2 + $0x8] sm:$0xff]
    %v48 = vld [vmem:[#allocation3] sm:$0xff]
    %v49 = vld [vmem:[#allocation3 + $0x8] sm:$0xff]
    %v50 = vld [vmem:[#allocation6] sm:$0xff]
    %v51 = vld [vmem:[#allocation6 + $0x8] sm:$0xff]
    %v52 = vld [vmem:[#allocation6 + $0x10] sm:$0xff]
    %v53 = vld [vmem:[#allocation6 + $0x18] sm:$0xff]
    %v54 = vld [vmem:[#allocation6 + $0x20] sm:$0xff]
    %v55 = vld [vmem:[#allocation6 + $0x28] sm:$0xff]
    %v56 = vld [vmem:[#allocation6 + $0x30] sm:$0xff]
    %v57 = vld [vmem:[#allocation6 + $0x38] sm:$0xff]
    %v58 = vld [vmem:[#allocation6 + $0x40] sm:$0xff]
    %v59 = vld [vmem:[#allocation6 + $0x48] sm:$0xff]
    %v60 = vld [vmem:[#allocation6 + $0x50] sm:$0xff]
    %v61 = vld [vmem:[#allocation6 + $0x58] sm:$0xff]
    %v62 = vld [vmem:[#allocation6 + $0x60] sm:$0xff]
    %v63 = vld [vmem:[#allocation6 + $0x68] sm:$0xff]
    %v64 = vld [vmem:[#allocation6 + $0x70] sm:$0xff]
    %v65 = vld [vmem:[#allocation6 + $0x78] sm:$0xff]
    %66 = vmatprep.subr.mxu0 0.0
    %67 = vmatpush1.msra.mxu0 %v50
    %68 = vmatprep.subr.mxu0 0.0
    %69 = vmatpush1.msra.mxu0 %v51
    %70 = vmatprep.subr.mxu0 0.0
    %71 = vmatpush1.msra.mxu0 %v52
    %72 = vmatprep.subr.mxu0 0.0
    %73 = vmatpush1.msra.mxu0 %v53
    %74 = vmatprep.subr.mxu0 0.0
    %75 = vmatpush1.msra.mxu0 %v54
    %76 = vmatprep.subr.mxu0 0.0
    %77 = vmatpush1.msra.mxu0 %v55
    %78 = vmatprep.subr.mxu0 0.0
    %79 = vmatpush1.msra.mxu0 %v56
    %80 = vmatprep.subr.mxu0 0.0
    %81 = vmatpush1.msra.mxu0 %v57
    %82 = vmatprep.subr.mxu0 0.0
    %83 = vmatpush1.msra.mxu0 %v58
    %84 = vmatprep.subr.mxu0 0.0
    %85 = vmatpush1.msra.mxu0 %v59
    %86 = vmatprep.subr.mxu0 0.0
    %87 = vmatpush1.msra.mxu0 %v60
    %88 = vmatprep.subr.mxu0 0.0
    %89 = vmatpush1.msra.mxu0 %v61
    %90 = vmatprep.subr.mxu0 0.0
    %91 = vmatpush1.msra.mxu0 %v62
    %92 = vmatprep.subr.mxu0 0.0
    %93 = vmatpush1.msra.mxu0 %v63
    %94 = vmatprep.subr.mxu0 0.0
    %95 = vmatpush1.msra.mxu0 %v64
    %96 = vmatprep.subr.mxu0 0.0
    %97 = vmatpush1.msra.mxu0 %v65
    %98 = vmatprep.subr.mxu0 0.0
    %99 = vmatpush1.msra.mxu0 0.0
    %100 = vmatprep.subr.mxu0 0.0
    %101 = vmatpush1.msra.mxu0 0.0
    %102 = vmatprep.subr.mxu0 0.0
    %103 = vmatpush1.msra.mxu0 0.0
    %104 = vmatprep.subr.mxu0 0.0
    %105 = vmatpush1.msra.mxu0 0.0
    %106 = vmatprep.subr.mxu0 0.0
    %107 = vmatpush1.msra.mxu0 0.0
    %108 = vmatprep.subr.mxu0 0.0
    %109 = vmatpush1.msra.mxu0 0.0
    %110 = vmatprep.subr.mxu0 0.0
    %111 = vmatpush1.msra.mxu0 0.0
    %112 = vmatprep.subr.mxu0 0.0
    %113 = vmatpush1.msra.mxu0 0.0
    %114 = vmatprep.subr.mxu0 0.0
    %115 = vmatpush1.msra.mxu0 0.0
    %116 = vmatprep.subr.mxu0 0.0
    %117 = vmatpush1.msra.mxu0 0.0
    %118 = vmatprep.subr.mxu0 0.0
    %119 = vmatpush1.msra.mxu0 0.0
    %120 = vmatprep.subr.mxu0 0.0
    %121 = vmatpush1.msra.mxu0 0.0
    %122 = vmatprep.subr.mxu0 0.0
    %123 = vmatpush1.msra.mxu0 0.0
    %124 = vmatprep.subr.mxu0 0.0
    %125 = vmatpush1.msra.mxu0 0.0
    %126 = vmatprep.subr.mxu0 0.0
    %127 = vmatpush1.msra.mxu0 0.0
    %128 = vmatprep.subr.mxu0 0.0
    %129 = vmatpush1.msra.mxu0 0.0
    %130 = vmatprep.mubr.f32.mxu0 0.0
    %131 = vmatmul.mubr.f32.gmra.mrb[0].mxu0 %v48
    %v132 = vpop.f32.mrb[0].mxu0
    %v133 = vadd.f32 0.0, %v132
    %v134 = vpop.f32.mrb[0].mxu0
    %135 = vmatprep.mubr.f32.mxu0 0.0
    %136 = vmatmul.mubr.f32.gmra.mrb[0].mxu0 %v49
    %v137 = vpop.f32.mrb[0].mxu0
    %v138 = vadd.f32 0.0, %v137
    %v139 = vpop.f32.mrb[0].mxu0
    %140 = vdwg.mxu0
    %v141 = vadd.f32 %v46, %v133
    %v142 = vadd.f32 %v47, %v138
    %143 = vst [vmem:[#allocation2] sm:$0xff] %v141
    %144 = vst [vmem:[#allocation2 + $0x8] sm:$0xff] %v142
    // Predicated region
    $region22: #{tpu_custom_call.1} parent=1 // pred_check
      %p145 = pneg %p40
    $region23: #{tpu_custom_call.1} parent=1 // pred_check_branch
      %147 = sbr.rel (%p145) target = $region25
    $region24: #{tpu_custom_call.1} parent=1 // pred_region
      %v148 = vld [vmem:[#allocation2] sm:$0xff]
      %v149 = vld [vmem:[#allocation2 + $0x8] sm:$0xff]
      %150 = vst [vmem:[#allocation8] sm:$0xff] %v148
      %151 = vst [vmem:[#allocation8 + $0x8] sm:$0xff] %v149
    $region25: #{tpu_custom_call.1} parent=1 // pred_fallthru
      _
    // Predicated region
    $region26: #{tpu_custom_call.1} parent=1 // pred_check
      _
    $region27: #{tpu_custom_call.1} parent=1 // pred_check_branch
      %153 = sbr.rel (0) target = $region29
    $region28: #{tpu_custom_call.1} parent=1 // pred_region
      %s155 = ssub.s32 256, 256
      %156 = vsyncadd [#allocation5], %s155
      %s157 = sshll.u32 [#allocation8], 4
      %s158 = int_to_ptr.vmem [resolvable:$true] %s157
      %163 = dma.vmem_to_hbm [thread:$0]  %s158, 256, %s2, [#allocation5], 128, 128, 8
    $region29: #{tpu_custom_call.1} parent=1 // pred_fallthru
      _
    // Predicated region
    $region30: #{tpu_custom_call.1} parent=1 // pred_check
      _
    $region31: #{tpu_custom_call.1} parent=1 // pred_check_branch
      %165 = sbr.rel (0) target = $region33
    $region32: #{tpu_custom_call.1} parent=1 // pred_region
      %166 = dma.done [#allocation5], 256
    $region33: #{tpu_custom_call.1} parent=1 // pred_fallthru
      _
    %167 = vsyncpa [#allocation4], 1
    %168 = vsyncpa [#allocation7], 1
    %169 = vsyncpa [#allocation5], 1

</llo_original>
